<compile_context>
chip_gen: v7x
topology: tpu7x:2x2x1
jax: 0.10.0
libtpu: 0.0.40
codegen_flags: <defaults>
</compile_context>

<pallas_src>
import functools

import jax
import jax.numpy as jnp
from jax.experimental import pallas as pl
from jax.experimental.pallas import tpu as pltpu

EMB_DIM = 128   # stand-in for the 512-d facenet embedding (small test size)
FEAT_DIM = 128  # stand-in for the LPIPS feature channels
C_PAD = 8       # channel axis padded 3 -> 8 (matched by zero weight rows)

_VMEM_LIMIT = 32 * 1024 * 1024  # explicit budget; safe on v5e/v6e/v7x


def _pick_chunk(total, max_chunk, align):
    """Largest multiple of `align` that divides `total` and is <= max_chunk."""
    d = (min(total, max_chunk) // align) * align
    while d >= align:
        if total % d == 0:
            return d
        d -= align
    return total


# ---------------------------------------------------------------------------
# Standalone tiled embedding (used once to precompute phi_x of the reference)
# ---------------------------------------------------------------------------
def _embed_kernel(flat_ref, w_ref, out_ref, acc_ref):
    k = pl.program_id(0)

    @pl.when(k == 0)
    def _():
        acc_ref[...] = jnp.zeros_like(acc_ref)

    img01 = (flat_ref[...] + 1.0) * 0.5  # mirrors `img = (img + 1) / 2`
    acc_ref[...] += jnp.dot(img01.astype(jnp.bfloat16), w_ref[...],
                            preferred_element_type=jnp.float32)

    @pl.when(k == pl.num_programs(0) - 1)
    def _():
        out_ref[...] = acc_ref[...]


def image_to_embeddings(img_nchw, w_emb_bf16, *, max_tk=512):
    # TODO(synk): MTCNN face cropping + pretrained InceptionResnetV1 have no
    # Pallas equivalent; replaced with a deterministic linear embedding.
    n, c, h, w = img_nchw.shape
    p_dim = n * c * h * w
    flat = img_nchw.reshape(1, p_dim).astype(jnp.float32)
    tk = _pick_chunk(p_dim, max_tk, 128)
    return pl.pallas_call(
        _embed_kernel,
        out_shape=jax.ShapeDtypeStruct((1, EMB_DIM), jnp.float32),
        grid_spec=pltpu.PrefetchScalarGridSpec(
            num_scalar_prefetch=0,
            grid=(p_dim // tk,),
            in_specs=[pl.BlockSpec((1, tk), lambda k: (0, k)),
                      pl.BlockSpec((tk, EMB_DIM), lambda k: (k, 0))],
            out_specs=pl.BlockSpec((1, EMB_DIM), lambda k: (0, 0)),
            scratch_shapes=[pltpu.VMEM((1, EMB_DIM), jnp.float32)]),
        compiler_params=pltpu.CompilerParams(
            dimension_semantics=("arbitrary",),
            vmem_limit_bytes=_VMEM_LIMIT),
    )(flat, w_emb_bf16)


# ---------------------------------------------------------------------------
# One-time precompute of the (constant) reference image's normalized features
# ---------------------------------------------------------------------------
def _ref_feat_kernel(x_pix_ref, w_feat_ref, f0_ref):
    x0 = 2.0 * x_pix_ref[...] - 1.0                      # (HW, C_PAD)
    f0 = jnp.dot(x0, w_feat_ref[...], preferred_element_type=jnp.float32)
    f0_ref[...] = f0 * jax.lax.rsqrt(
        jnp.sum(f0 * f0, axis=-1, keepdims=True) + 1e-10)


# ---------------------------------------------------------------------------
# Fused kernel: tiled embedding matvec + l2_gain + LPIPS-style distance + loss
# ---------------------------------------------------------------------------
def _cloak_fused_kernel(flatc_ref, w_emb_ref, phi_x_ref, xc_pix_ref,
                        f0_ref, w_feat_ref, out_ref, acc_ref,
                        *, alpha, p, hw, pix_chunk):
    k = pl.program_id(0)

    @pl.when(k == 0)
    def _():
        acc_ref[...] = jnp.zeros_like(acc_ref)

    # ---- embedding of the cloaked image, K-tiled, bf16 MXU, f32 accum ----
    img01 = (flatc_ref[...] + 1.0) * 0.5  # mirrors `img = (img + 1) / 2`
    acc_ref[...] += jnp.dot(img01.astype(jnp.bfloat16), w_emb_ref[...],
                            preferred_element_type=jnp.float32)

    @pl.when(k == pl.num_programs(0) - 1)
    def _():
        # l2_gain = ||phi_x_cloaked - phi_x||_2 ** 2
        dphi = acc_ref[...] - phi_x_ref[...]
        l2_gain = jnp.sum(dphi * dphi)

        # TODO(synk): pretrained LPIPS(net='alex') replaced by a single-layer
        # LPIPS-style distance: per-pixel 1x1 "conv" (channel matmul), unit
        # feature normalization, squared diff vs. cached reference features,
        # channel sum, spatial mean.  Chunked over pixels to stay in-vreg.
        wf = w_feat_ref[...]
        n_chunks = hw // pix_chunk

        def body(c, ssum):
            i = pl.multiple_of(c * pix_chunk, pix_chunk)
            xc = 2.0 * xc_pix_ref[pl.ds(i, pix_chunk), :] - 1.0
            fc = jnp.dot(xc, wf, preferred_element_type=jnp.float32)
            fc = fc * jax.lax.rsqrt(
                jnp.sum(fc * fc, axis=-1, keepdims=True) + 1e-10)
            d = fc - f0_ref[pl.ds(i, pix_chunk), :]
            return ssum + jnp.sum(d * d)

        ssum = jax.lax.fori_loop(0, n_chunks, body, jnp.float32(0.0),
                                 unroll=True)
        lpips_loss = ssum / jnp.float32(hw)

        penalty = jnp.maximum(lpips_loss - p, 0.0)
        total = alpha * penalty - l2_gain

        # Pack (total, l2_gain, lpips_loss) into one lane-dense (1, 128) row.
        lane = jax.lax.broadcasted_iota(jnp.int32, (1, 128), 1)
        out_ref[...] = jnp.where(
            lane == 0, total,
            jnp.where(lane == 1, l2_gain,
                      jnp.where(lane == 2, lpips_loss, 0.0)))


# ---------------------------------------------------------------------------
# Module wrapper (mirrors CloakLoss.__init__ / forward)
# ---------------------------------------------------------------------------
def _to_pix(img_chw):
    # TODO(synk): this NCHW -> (HW, C_PAD) layout transform could be folded
    # into the BlockSpec / an in-kernel transpose for large images.
    c, hh, ww = img_chw.shape
    pix = jnp.transpose(img_chw.reshape(c, hh * ww)).astype(jnp.float32)
    return jnp.pad(pix, ((0, 0), (0, C_PAD - c)))  # (HW, C_PAD)


class CloakLoss:
    def __init__(self, alpha, p, x, phi_x, w_emb_bf16, w_feat):
        self.alpha = float(alpha)
        self.p = float(p)
        self.phi_x = phi_x          # (1, EMB_DIM) reference embedding
        self.w_emb = w_emb_bf16     # (N*C*H*W, EMB_DIM) bf16 synthetic weights
        self.w_feat = w_feat        # (C_PAD, FEAT_DIM) synthetic LPIPS weights

        # Constant-reference precompute: pixel layout + normalized features.
        x_pix = _to_pix(x[0])
        self.hw = x_pix.shape[0]
        self.f0 = pl.pallas_call(
            _ref_feat_kernel,
            out_shape=jax.ShapeDtypeStruct((self.hw, FEAT_DIM), jnp.float32),
            in_specs=[pl.BlockSpec(memory_space=pltpu.MemorySpace.VMEM),
                      pl.BlockSpec(memory_space=pltpu.MemorySpace.VMEM)],
            out_specs=pl.BlockSpec(memory_space=pltpu.MemorySpace.VMEM),
        )(x_pix, w_feat)

    def forward(self, x_cloaked):
        n, c, h, w = x_cloaked.shape
        p_dim = n * c * h * w
        flat_c = x_cloaked.reshape(1, p_dim).astype(jnp.float32)
        xc_pix = _to_pix(x_cloaked[0])

        tk = _pick_chunk(p_dim, 512, 128)          # K tile of the w_emb stream
        pix_chunk = _pick_chunk(self.hw, 128, 8)   # LPIPS pixel chunk

        kernel = functools.partial(
            _cloak_fused_kernel, alpha=self.alpha, p=self.p,
            hw=self.hw, pix_chunk=pix_chunk)

        packed = pl.pallas_call(
            kernel,
            out_shape=jax.ShapeDtypeStruct((1, 128), jnp.float32),
            grid_spec=pltpu.PrefetchScalarGridSpec(
                num_scalar_prefetch=0,
                grid=(p_dim // tk,),
                in_specs=[
                    pl.BlockSpec((1, tk), lambda k: (0, k)),            # flat_c
                    pl.BlockSpec((tk, EMB_DIM), lambda k: (k, 0)),      # w_emb
                    pl.BlockSpec((1, EMB_DIM), lambda k: (0, 0)),       # phi_x
                    pl.BlockSpec((self.hw, C_PAD), lambda k: (0, 0)),   # xc_pix
                    pl.BlockSpec((self.hw, FEAT_DIM), lambda k: (0, 0)),  # f0
                    pl.BlockSpec((C_PAD, FEAT_DIM), lambda k: (0, 0)),  # w_feat
                ],
                out_specs=pl.BlockSpec((1, 128), lambda k: (0, 0)),
                scratch_shapes=[pltpu.VMEM((1, EMB_DIM), jnp.float32)]),
            compiler_params=pltpu.CompilerParams(
                dimension_semantics=("arbitrary",),
                vmem_limit_bytes=_VMEM_LIMIT),
        )(flat_c, self.w_emb, self.phi_x, xc_pix, self.f0, self.w_feat)

        # No host sync: async logging of the diagnostics, like the PyTorch print.
        jax.debug.print("l2_gain: {l2} \t lpips_loss: {lp}",
                        l2=packed[0, 1], lp=packed[0, 2])
        return packed[0, 0]


if __name__ == "__main__":
    key = jax.random.PRNGKey(0)
    k1, k2, k3, k4 = jax.random.split(key, 4)

    N, C, H, W = 1, 3, 16, 16
    x = jax.random.uniform(k1, (N, C, H, W), jnp.float32)  # image in [0, 1]
    x_cloaked = jnp.clip(
        x + 0.05 * jax.random.normal(k2, (N, C, H, W), jnp.float32), 0.0, 1.0)

    # Deterministic synthetic weights for the embedding / LPIPS stand-ins.
    w_emb = (0.02 * jax.random.normal(
        k3, (N * C * H * W, EMB_DIM), jnp.float32)).astype(jnp.bfloat16)
    w_feat = 0.5 * jax.random.normal(k4, (C, FEAT_DIM), jnp.float32)
    w_feat = jnp.pad(w_feat, ((0, C_PAD - C), (0, 0)))  # zero rows for padding

    # phi_x is precomputed (as in the PyTorch module's __init__ usage).
    phi_x = image_to_embeddings(x, w_emb)

    loss_mod = CloakLoss(alpha=10.0, p=0.05, x=x, phi_x=phi_x,
                         w_emb_bf16=w_emb, w_feat=w_feat)
    total_loss = loss_mod.forward(x_cloaked)
    jax.block_until_ready(total_loss)
    print("KERNEL_OK")
</pallas_src>

<mosaic_0001>
module attributes {stable_mosaic.version = 11 : i64} {
  func.func @_embed_kernel(%arg0: i32, %arg1: memref<1x384xf32, #tpu.memory_space<vmem>>, %arg2: memref<384x128xbf16, #tpu.memory_space<vmem>>, %arg3: memref<1x128xf32, #tpu.memory_space<vmem>>, %arg4: memref<1x128xf32, #tpu.memory_space<vmem>>) attributes {dimension_semantics = [#tpu.dimension_semantics<arbitrary>], iteration_bounds = array<i64: 2>, scalar_prefetch = 0 : i64, scratch_operands = 1 : i64, tpu.core_type = #tpu.core_type<tc>, window_params = [{transform_indices = @transform_0, window_bounds = array<i64: 1, 384>}, {transform_indices = @transform_1, window_bounds = array<i64: 384, 128>}, {pipeline_mode = #tpu.pipeline_mode<synchronous>, transform_indices = @transform_2, window_bounds = array<i64: 1, 128>}]} {
    %c0_i32 = arith.constant 0 : i32
    %0 = arith.cmpi eq, %arg0, %c0_i32 : i32
    %1 = arith.extui %0 : i1 to i32
    %c0_i32_0 = arith.constant 0 : i32
    %2 = arith.cmpi ne, %1, %c0_i32_0 : i32
    scf.if %2 {
      %cst_11 = arith.constant 0.000000e+00 : f32
      %17 = vector.broadcast %cst_11 : f32 to vector<1x128xf32>
      %c0_12 = arith.constant 0 : index
      %c0_13 = arith.constant 0 : index
      %18 = vector.load %arg4[%c0_12, %c0_13] : memref<1x128xf32, #tpu.memory_space<vmem>>, vector<1x128xf32>
      tpu.vector_store %arg4[%c0_12, %c0_13], %17 {strides = array<i32>} : memref<1x128xf32, #tpu.memory_space<vmem>>, vector<1x128xf32>,
    } else {
    }
    %c0 = arith.constant 0 : index
    %c0_1 = arith.constant 0 : index
    %3 = vector.load %arg1[%c0, %c0_1] : memref<1x384xf32, #tpu.memory_space<vmem>>, vector<1x384xf32>
    %cst = arith.constant 1.000000e+00 : f32
    %4 = vector.broadcast %cst : f32 to vector<1x384xf32>
    %5 = arith.addf %3, %4 : vector<1x384xf32>
    %cst_2 = arith.constant 5.000000e-01 : f32
    %6 = vector.broadcast %cst_2 : f32 to vector<1x384xf32>
    %7 = arith.mulf %5, %6 : vector<1x384xf32>
    %c0_3 = arith.constant 0 : index
    %c0_4 = arith.constant 0 : index
    %8 = vector.load %arg4[%c0_3, %c0_4] : memref<1x128xf32, #tpu.memory_space<vmem>>, vector<1x128xf32>
    %9 = arith.truncf %7 : vector<1x384xf32> to vector<1x384xbf16>
    %c0_5 = arith.constant 0 : index
    %c0_6 = arith.constant 0 : index
    %10 = vector.load %arg2[%c0_5, %c0_6] : memref<384x128xbf16, #tpu.memory_space<vmem>>, vector<384x128xbf16>
    %cst_7 = arith.constant dense<0.000000e+00> : vector<1x128xf32>
    %11 = tpu.matmul %9, %10, %cst_7 {dimension_numbers = #tpu.dot_dimension_numbers<[1], [0], [0], [1], [0, 0, 1, 1], [], []>} : vector<1x384xbf16>, vector<384x128xbf16>, vector<1x128xf32> -> vector<1x128xf32>
    %12 = arith.addf %8, %11 : vector<1x128xf32>
    %c0_8 = arith.constant 0 : index
    %c0_9 = arith.constant 0 : index
    %13 = vector.load %arg4[%c0_8, %c0_9] : memref<1x128xf32, #tpu.memory_space<vmem>>, vector<1x128xf32>
    tpu.vector_store %arg4[%c0_8, %c0_9], %12 {strides = array<i32>} : memref<1x128xf32, #tpu.memory_space<vmem>>, vector<1x128xf32>,
    %c1_i32 = arith.constant 1 : i32
    %14 = arith.cmpi eq, %arg0, %c1_i32 : i32
    %15 = arith.extui %14 : i1 to i32
    %c0_i32_10 = arith.constant 0 : i32
    %16 = arith.cmpi ne, %15, %c0_i32_10 : i32
    scf.if %16 {
      %c0_11 = arith.constant 0 : index
      %c0_12 = arith.constant 0 : index
      %17 = vector.load %arg4[%c0_11, %c0_12] : memref<1x128xf32, #tpu.memory_space<vmem>>, vector<1x128xf32>
      %c0_13 = arith.constant 0 : index
      %c0_14 = arith.constant 0 : index
      %18 = vector.load %arg3[%c0_13, %c0_14] : memref<1x128xf32, #tpu.memory_space<vmem>>, vector<1x128xf32>
      tpu.vector_store %arg3[%c0_13, %c0_14], %17 {strides = array<i32>} : memref<1x128xf32, #tpu.memory_space<vmem>>, vector<1x128xf32>,
    } else {
    }
    return
  }
  func.func @transform_0(%arg0: i32) -> (i32, i32) {
    %c0_i32 = arith.constant 0 : i32
    %c0_i32_0 = arith.constant 0 : i32
    return %c0_i32, %arg0 : i32, i32
  }
  func.func @transform_1(%arg0: i32) -> (i32, i32) {
    %c0_i32 = arith.constant 0 : i32
    %c0_i32_0 = arith.constant 0 : i32
    return %arg0, %c0_i32 : i32, i32
  }
  func.func @transform_2(%arg0: i32) -> (i32, i32) {
    %c0_i32 = arith.constant 0 : i32
    %c0_i32_0 = arith.constant 0 : i32
    %c0_i32_1 = arith.constant 0 : i32
    return %c0_i32, %c0_i32_0 : i32, i32
  }
}

</mosaic_0001>

<llo_original>
// kernel: tpu_custom_call.1
$region0: #{tpu_custom_call.1}
  #allocation0 [shape = 'u32[]', space=smem, size = 0x4, offset = 0x4, fixed_abs, tag = 'smem constant byte address 0x4 - core index']
  #allocation1 [shape = 'u32[144,128]{1,0:T(1,128)}', space=vmem, size = 0x12000, scoped, tag = 'internal scratch']
  #allocation2 [shape = 'f32[1,128]{1,0:T(1,128)}', space=vmem, size = 0x200, scoped, tag = 'scratch operand']
  %s0 = inlined_call_operand.hbm [shape: f32[1,768], index: 0, kind: input, shape index: {}]
  %s1 = inlined_call_operand.hbm [shape: bf16[768,128], index: 1, kind: input, shape index: {}]
  %s2 = inlined_call_operand.hbm [shape: f32[1,128], index: 2, kind: output, shape index: {}]
  %s3 = sld [smem:[#allocation0]]
  $region57: #{tpu_custom_call.1} parent=0
    _
  %s5 = ssub.s32 1, %s3
  %s6 = scalar_select 0, %s5, %s3
  $region1: #{tpu_custom_call.1} parent=0
    #allocation3 [shape = 'u8[3072]{0}', space=vmem, size = 0xc00, scoped, tag = 'input window, operand 0']
    #allocation4 [shape = 's32[2]{0}', space=sflag, size = 0x8, scoped, tag = 'scoped memory for tpu_custom_call.1']
    #allocation5 [shape = 's32[2]{0}', space=sflag, size = 0x8, scoped, tag = 'scoped memory for tpu_custom_call.1']
    #allocation6 [shape = 'u8[196608]{0}', space=vmem, size = 0x30000, scoped, tag = 'input window, operand 1']
    #allocation7 [shape = 's32[2]{0}', space=sflag, size = 0x8, scoped, tag = 'scoped memory for tpu_custom_call.1']
    #allocation8 [shape = 'u8[512]{0}', space=vmem, size = 0x400, scoped, tag = 'output window, operand 0, single buffered']
    %7 = vsyncpa [#allocation4], 0
    %s8 = scalar_lea.sflag [#allocation4], 1
    %9 = vsyncpa %s8, 0
    %10 = vsyncpa [#allocation7], 0
    %s11 = scalar_lea.sflag [#allocation7], 1
    %12 = vsyncpa %s11, 0
    %13 = vsyncpa [#allocation5], 0
    loop: start=0, step=1, limit=4
    $region2: #{tpu_custom_call.1} parent=1 // loop_pre_header
      _
    $region3: #{tpu_custom_call.1} parent=1 // loop_header
      %s15 = sphi 0, %s19
      %p16 = scmp.ge.s32.totalorder %s15, 4
      %s25 = sphi 0, %s27
      %s28 = sphi 0, %s25
      %s29 = sphi 0, %s28
      %s45 = sphi 0, %s29
      %s51 = sphi 0, %s53
      %s54 = sphi 0, %s51
      %s55 = sphi 0, %s54
      %s71 = sphi 0, %s55
      %s75 = sphi 0, %s75
      %s77 = sphi 0, %s75
      %s78 = sphi 0, %s77
      %s92 = sphi 0, %s78
    $region4: #{tpu_custom_call.1} parent=1 // loop_header_branch
      %18 = sbr.rel (%p16) target = $region8
    $region5: #{tpu_custom_call.1} parent=1 // loop_body
      %s20 = ssub.s32 %s15, 1
      %s21 = ssub.s32 %s15, 2
      %s22 = sadd.s32 %s15, 1
      %s23 = ssub.s32 %s15, %s22
      %p24 = scmp.eq.s32.totalorder %s23, 0
      %s26 = sadd.s32 %s25, 1
      %s27 = scalar_select %p24, %s25, %s26
      %p30 = pneg %p24
      %p31 = scmp.eq.s32.totalorder %s15, 1
      %p32 = por %p30, %p31
      %p33 = scmp.ne.s32.totalorder %s25, %s28
      %p34 = scmp.eq.s32.totalorder %s15, 0
      %p35 = por %p33, %p34
      %p36 = scmp.ne.s32.totalorder %s25, %s28
      %p37 = scmp.eq.s32.totalorder %s20, 1
      %p38 = por %p36, %p37
      %p39 = scmp.ne.s32.totalorder %s28, %s29
      %p40 = scmp.eq.s32.totalorder %s20, 0
      %p41 = por %p39, %p40
      %p42 = scmp.ne.s32.totalorder %s28, %s29
      %p43 = scmp.eq.s32.totalorder %s21, 1
      %p44 = por %p42, %p43
      %p46 = scmp.ne.s32.totalorder %s29, %s45
      %p47 = scmp.eq.s32.totalorder %s21, 0
      %p48 = por %p46, %p47
      %s49 = ssub.s32 %s15, %s22
      %p50 = scmp.eq.s32.totalorder %s49, 0
      %s52 = sadd.s32 %s51, 1
      %s53 = scalar_select %p50, %s51, %s52
      %p56 = pneg %p50
      %p57 = scmp.eq.s32.totalorder %s15, 1
      %p58 = por %p56, %p57
      %p59 = scmp.ne.s32.totalorder %s51, %s54
      %p60 = scmp.eq.s32.totalorder %s15, 0
      %p61 = por %p59, %p60
      %p62 = scmp.ne.s32.totalorder %s51, %s54
      %p63 = scmp.eq.s32.totalorder %s20, 1
      %p64 = por %p62, %p63
      %p65 = scmp.ne.s32.totalorder %s54, %s55
      %p66 = scmp.eq.s32.totalorder %s20, 0
      %p67 = por %p65, %p66
      %p68 = scmp.ne.s32.totalorder %s54, %s55
      %p69 = scmp.eq.s32.totalorder %s21, 1
      %p70 = por %p68, %p69
      %p72 = scmp.ne.s32.totalorder %s55, %s71
      %p73 = scmp.eq.s32.totalorder %s21, 0
      %p74 = por %p72, %p73
      %s76 = sadd.s32 %s75, 1
      %p79 = scmp.eq.s32.totalorder %s15, 1
      %p80 = scmp.ne.s32.totalorder %s75, %s77
      %p81 = scmp.eq.s32.totalorder %s15, 0
      %p82 = por %p80, %p81
      %p83 = scmp.ne.s32.totalorder %s75, %s77
      %p84 = scmp.eq.s32.totalorder %s20, 1
      %p85 = por %p83, %p84
      %p86 = scmp.ne.s32.totalorder %s77, %s78
      %p87 = scmp.eq.s32.totalorder %s20, 0
      %p88 = por %p86, %p87
      %p89 = scmp.ne.s32.totalorder %s77, %s78
      %p90 = scmp.eq.s32.totalorder %s21, 1
      %p91 = por %p89, %p90
      %p93 = scmp.ne.s32.totalorder %s78, %s92
      %p94 = scmp.eq.s32.totalorder %s21, 0
      %p95 = por %p93, %p94
      %p96 = scmp.le.s32.totalorder 1, %s15
      %p97 = scmp.lt.s32.totalorder %s15, 3
      %p98 = pnand %p96, %p97
      %p99 = pneg %p98
      // Predicated region
      $region9: #{tpu_custom_call.1} parent=5 // pred_check
        _
      $region10: #{tpu_custom_call.1} parent=5 // pred_check_branch
        %101 = sbr.rel (%p98) target = $region12
      $region11: #{tpu_custom_call.1} parent=5 // pred_region
        %s102 = ssub.s32 %s15, 1
      $region12: #{tpu_custom_call.1} parent=5 // pred_fallthru
        _
      %p103 = scmp.lt.s32.totalorder %s15, 2
      // Predicated region
      $region13: #{tpu_custom_call.1} parent=5 // pred_check
        %p104 = pneg %p103
      $region14: #{tpu_custom_call.1} parent=5 // pred_check_branch
        %106 = sbr.rel (%p104) target = $region16
      $region15: #{tpu_custom_call.1} parent=5 // pred_region
        // Predicated region
        $region17: #{tpu_custom_call.1} parent=15 // pred_check
          %p107 = pneg %p35
        $region18: #{tpu_custom_call.1} parent=15 // pred_check_branch
          %109 = sbr.rel (%p107) target = $region20
        $region19: #{tpu_custom_call.1} parent=15 // pred_region
          %s110 = sand.u32 %s25, 1
          %s111 = scalar_lea.sflag [#allocation4], %s110
          %s112 = sand.u32 %s25, 1
          %s113 = smul.addr %s112, 3
          %s114 = scalar_lea.vmem [#allocation3], %s113
          %s115 = smul.u32 3, %s15
          %s117 = ssub.s32 48, 48
          %118 = vsyncadd %s111, %s117
          %s119 = smul.addr %s115, 16
          %s120 = scalar_lea.hbm %s0, %s119
          %s122 = sshll.u32 %s114, 4
          %s123 = int_to_ptr.vmem [resolvable:$true] %s122
          %125 = dma.hbm_to_vmem [thread:$0]  %s120, 48, %s123, %s111
        $region20: #{tpu_custom_call.1} parent=15 // pred_fallthru
          _
        // Predicated region
        $region21: #{tpu_custom_call.1} parent=15 // pred_check
          %p126 = pneg %p61
        $region22: #{tpu_custom_call.1} parent=15 // pred_check_branch
          %128 = sbr.rel (%p126) target = $region24
        $region23: #{tpu_custom_call.1} parent=15 // pred_region
          %s129 = sand.u32 %s51, 1
          %s130 = scalar_lea.sflag [#allocation7], %s129
          %s131 = sand.u32 %s51, 1
          %s132 = smul.addr %s131, 192
          %s133 = scalar_lea.vmem [#allocation6], %s132
          %s134 = smul.u32 48, %s15
          %s136 = ssub.s32 3072, 3072
          %137 = vsyncadd %s130, %s136
          %s138 = smul.addr %s134, 64
          %s139 = scalar_lea.hbm %s1, %s138
          %s140 = sshll.u32 %s133, 4
          %s141 = int_to_ptr.vmem [resolvable:$true] %s140
          %146 = dma.hbm_to_vmem [thread:$0]  %s139, 3072, %s141, %s130, 64, 64, 4
        $region24: #{tpu_custom_call.1} parent=15 // pred_fallthru
          _
      $region16: #{tpu_custom_call.1} parent=5 // pred_fallthru
        _
      %p147 = scmp.le.s32.totalorder 1, %s15
      %p148 = scmp.lt.s32.totalorder %s15, 3
      %p149 = pnand %p147, %p148
      %p150 = pneg %p149
      // Predicated region
      $region25: #{tpu_custom_call.1} parent=5 // pred_check
        _
      $region26: #{tpu_custom_call.1} parent=5 // pred_check_branch
        %152 = sbr.rel (%p149) target = $region28
      $region27: #{tpu_custom_call.1} parent=5 // pred_region
        %s153 = ssub.s32 %s15, 1
        %s154 = sand.u32 %s28, 1
        %s155 = scalar_lea.sflag [#allocation4], %s154
        %s156 = sand.u32 %s28, 1
        %s157 = smul.addr %s156, 3
        %s158 = scalar_lea.vmem [#allocation3], %s157
        // Predicated region
        $region29: #{tpu_custom_call.1} parent=27 // pred_check
          %p159 = pneg %p41
        $region30: #{tpu_custom_call.1} parent=27 // pred_check_branch
          %161 = sbr.rel (%p159) target = $region32
        $region31: #{tpu_custom_call.1} parent=27 // pred_region
          %162 = dma.done %s155, 48
        $region32: #{tpu_custom_call.1} parent=27 // pred_fallthru
          _
        %s163 = sand.u32 %s54, 1
        %s164 = scalar_lea.sflag [#allocation7], %s163
        %s165 = sand.u32 %s54, 1
        %s166 = smul.addr %s165, 192
        %s167 = scalar_lea.vmem [#allocation6], %s166
        // Predicated region
        $region33: #{tpu_custom_call.1} parent=27 // pred_check
          %p168 = pneg %p67
        $region34: #{tpu_custom_call.1} parent=27 // pred_check_branch
          %170 = sbr.rel (%p168) target = $region36
        $region35: #{tpu_custom_call.1} parent=27 // pred_region
          %171 = dma.done %s164, 3072
        $region36: #{tpu_custom_call.1} parent=27 // pred_fallthru
          _
        %s172 = sand.u32 %s28, 1
        %s173 = scalar_lea.sflag [#allocation4], %s172
        %s174 = sand.u32 %s28, 1
        %s175 = smul.addr %s174, 3
        %s176 = scalar_lea.vmem [#allocation3], %s175
        %p177 = pneg %p41
        %p178 = pneg %p38
        %s179 = sand.u32 %s54, 1
        %s180 = scalar_lea.sflag [#allocation7], %s179
        %s181 = sand.u32 %s54, 1
        %s182 = smul.addr %s181, 192
        %s183 = scalar_lea.vmem [#allocation6], %s182
        %p184 = pneg %p67
        %p185 = pneg %p64
        %p186 = pneg %p88
        %p187 = pneg %p85
        %s188 = smul.u32 3, %s20
        %s189 = smul.u32 48, %s20
        %p191 = scmp.eq.s32.totalorder %s20, 0
        // Predicated region
        $region37: #{tpu_custom_call.1} parent=27 // pred_check
          %p192 = pneg %p191
        $region38: #{tpu_custom_call.1} parent=27 // pred_check_branch
          %194 = sbr.rel (%p192) target = $region40
        $region39: #{tpu_custom_call.1} parent=27 // pred_region
          %195 = vst [vmem:[#allocation2] sm:$0x1] 0.0
        $region40: #{tpu_custom_call.1} parent=27 // pred_fallthru
          _
        %v196 = vld [vmem:[%s158] sm:$0x7]
        %v197 = vadd.f32 %v196, 1.0
        %v198 = vmul.f32 %v197, 0.5
        %v199 = vld [vmem:[#allocation2] sm:$0x1]
        %v201 = vlaneseq
        %v202 = vshrl.u32 %v201, 7
        %v203 = vsub.s32 0, %v202
        %v204 = vrot.slane %v198, %v203
        %v205 = vlaneseq
        %v206 = vshrl.u32 %v205, 7
        %v207 = vsub.s32 1, %v206
        %v208 = vrot.slane %v198, %v207
        %v209 = vlaneseq
        %v210 = vshrl.u32 %v209, 7
        %v211 = vsub.s32 2, %v210
        %v212 = vrot.slane %v198, %v211
        %v216 = vpack.c.bf16 %v204, %v204
        %v217 = vpack.c.bf16 %v208, %v208
        %v218 = vpack.c.bf16 %v212, %v212
        %v219 = vld [vmem:[%s167] sm:$0xf]
        %v220 = vld [vmem:[%s167 + $0x4] sm:$0xf]
        %v221 = vld [vmem:[%s167 + $0x8] sm:$0xf]
        %v222 = vld [vmem:[%s167 + $0xc] sm:$0xf]
        %v223 = vld [vmem:[%s167 + $0x10] sm:$0xf]
        %v224 = vld [vmem:[%s167 + $0x14] sm:$0xf]
        %v225 = vld [vmem:[%s167 + $0x18] sm:$0xf]
        %v226 = vld [vmem:[%s167 + $0x1c] sm:$0xf]
        %v227 = vld [vmem:[%s167 + $0x20] sm:$0xf]
        %v228 = vld [vmem:[%s167 + $0x24] sm:$0xf]
        %v229 = vld [vmem:[%s167 + $0x28] sm:$0xf]
        %v230 = vld [vmem:[%s167 + $0x2c] sm:$0xf]
        %v231 = vld [vmem:[%s167 + $0x30] sm:$0xf]
        %v232 = vld [vmem:[%s167 + $0x34] sm:$0xf]
        %v233 = vld [vmem:[%s167 + $0x38] sm:$0xf]
        %v234 = vld [vmem:[%s167 + $0x3c] sm:$0xf]
        %v235 = vld [vmem:[%s167 + $0x40] sm:$0xf]
        %v236 = vld [vmem:[%s167 + $0x44] sm:$0xf]
        %v237 = vld [vmem:[%s167 + $0x48] sm:$0xf]
        %v238 = vld [vmem:[%s167 + $0x4c] sm:$0xf]
        %v239 = vld [vmem:[%s167 + $0x50] sm:$0xf]
        %v240 = vld [vmem:[%s167 + $0x54] sm:$0xf]
        %v241 = vld [vmem:[%s167 + $0x58] sm:$0xf]
        %v242 = vld [vmem:[%s167 + $0x5c] sm:$0xf]
        %v243 = vld [vmem:[%s167 + $0x60] sm:$0xf]
        %v244 = vld [vmem:[%s167 + $0x64] sm:$0xf]
        %v245 = vld [vmem:[%s167 + $0x68] sm:$0xf]
        %v246 = vld [vmem:[%s167 + $0x6c] sm:$0xf]
        %v247 = vld [vmem:[%s167 + $0x70] sm:$0xf]
        %v248 = vld [vmem:[%s167 + $0x74] sm:$0xf]
        %v249 = vld [vmem:[%s167 + $0x78] sm:$0xf]
        %v250 = vld [vmem:[%s167 + $0x7c] sm:$0xf]
        %v251 = vld [vmem:[%s167 + $0x80] sm:$0xf]
        %v252 = vld [vmem:[%s167 + $0x84] sm:$0xf]
        %v253 = vld [vmem:[%s167 + $0x88] sm:$0xf]
        %v254 = vld [vmem:[%s167 + $0x8c] sm:$0xf]
        %v255 = vld [vmem:[%s167 + $0x90] sm:$0xf]
        %v256 = vld [vmem:[%s167 + $0x94] sm:$0xf]
        %v257 = vld [vmem:[%s167 + $0x98] sm:$0xf]
        %v258 = vld [vmem:[%s167 + $0x9c] sm:$0xf]
        %v259 = vld [vmem:[%s167 + $0xa0] sm:$0xf]
        %v260 = vld [vmem:[%s167 + $0xa4] sm:$0xf]
        %v261 = vld [vmem:[%s167 + $0xa8] sm:$0xf]
        %v262 = vld [vmem:[%s167 + $0xac] sm:$0xf]
        %v263 = vld [vmem:[%s167 + $0xb0] sm:$0xf]
        %v264 = vld [vmem:[%s167 + $0xb4] sm:$0xf]
        %v265 = vld [vmem:[%s167 + $0xb8] sm:$0xf]
        %v266 = vld [vmem:[%s167 + $0xbc] sm:$0xf]
        %v315 = vunpack.c.l.b16 %v219
        %v316 = vunpack.c.l.b16 %v220
        %v317 = vunpack.c.l.b16 %v221
        %v318 = vunpack.c.l.b16 %v222
        %v319 = vunpack.c.l.b16 %v223
        %v320 = vunpack.c.l.b16 %v224
        %v321 = vunpack.c.l.b16 %v225
        %v322 = vunpack.c.l.b16 %v226
        %v323 = vunpack.c.l.b16 %v227
        %v324 = vunpack.c.l.b16 %v228
        %v325 = vunpack.c.l.b16 %v229
        %v326 = vunpack.c.l.b16 %v230
        %v327 = vunpack.c.l.b16 %v231
        %v328 = vunpack.c.l.b16 %v232
        %v329 = vunpack.c.l.b16 %v233
        %v330 = vunpack.c.l.b16 %v234
        %v331 = vunpack.c.l.b16 %v235
        %v332 = vunpack.c.l.b16 %v236
        %v333 = vunpack.c.l.b16 %v237
        %v334 = vunpack.c.l.b16 %v238
        %v335 = vunpack.c.l.b16 %v239
        %v336 = vunpack.c.l.b16 %v240
        %v337 = vunpack.c.l.b16 %v241
        %v338 = vunpack.c.l.b16 %v242
        %v339 = vunpack.c.l.b16 %v243
        %v340 = vunpack.c.l.b16 %v244
        %v341 = vunpack.c.l.b16 %v245
        %v342 = vunpack.c.l.b16 %v246
        %v343 = vunpack.c.l.b16 %v247
        %v344 = vunpack.c.l.b16 %v248
        %v345 = vunpack.c.l.b16 %v249
        %v346 = vunpack.c.l.b16 %v250
        %v347 = vunpack.c.l.b16 %v251
        %v348 = vunpack.c.l.b16 %v252
        %v349 = vunpack.c.l.b16 %v253
        %v350 = vunpack.c.l.b16 %v254
        %v351 = vunpack.c.l.b16 %v255
        %v352 = vunpack.c.l.b16 %v256
        %v353 = vunpack.c.l.b16 %v257
        %v354 = vunpack.c.l.b16 %v258
        %v355 = vunpack.c.l.b16 %v259
        %v356 = vunpack.c.l.b16 %v260
        %v357 = vunpack.c.l.b16 %v261
        %v358 = vunpack.c.l.b16 %v262
        %v359 = vunpack.c.l.b16 %v263
        %v360 = vunpack.c.l.b16 %v264
        %v361 = vunpack.c.l.b16 %v265
        %v362 = vunpack.c.l.b16 %v266
        %v363 = vpack.c.b16 %v316, %v315
        %v364 = vpack.c.b16 %v318, %v317
        %v365 = vpack.c.b16 %v320, %v319
        %v366 = vpack.c.b16 %v322, %v321
        %v367 = vpack.c.b16 %v324, %v323
        %v368 = vpack.c.b16 %v326, %v325
        %v369 = vpack.c.b16 %v328, %v327
        %v370 = vpack.c.b16 %v330, %v329
        %v371 = vpack.c.b16 %v332, %v331
        %v372 = vpack.c.b16 %v334, %v333
        %v373 = vpack.c.b16 %v336, %v335
        %v374 = vpack.c.b16 %v338, %v337
        %v375 = vpack.c.b16 %v340, %v339
        %v376 = vpack.c.b16 %v342, %v341
        %v377 = vpack.c.b16 %v344, %v343
        %v378 = vpack.c.b16 %v346, %v345
        %v379 = vpack.c.b16 %v348, %v347
        %v380 = vpack.c.b16 %v350, %v349
        %v381 = vpack.c.b16 %v352, %v351
        %v382 = vpack.c.b16 %v354, %v353
        %v383 = vpack.c.b16 %v356, %v355
        %v384 = vpack.c.b16 %v358, %v357
        %v385 = vpack.c.b16 %v360, %v359
        %v386 = vpack.c.b16 %v362, %v361
        %411 = vmatprep.subr.bf16.mxu0 0
        %412 = vmatpush1.bf16.msra.mxu0 %v363
        %413 = vmatprep.subr.bf16.mxu0 0
        %414 = vmatpush1.bf16.msra.mxu0 %v364
        %415 = vmatprep.subr.bf16.mxu0 0
        %416 = vmatpush1.bf16.msra.mxu0 %v365
        %417 = vmatprep.subr.bf16.mxu0 0
        %418 = vmatpush1.bf16.msra.mxu0 %v366
        %419 = vmatprep.subr.bf16.mxu0 0
        %420 = vmatpush1.bf16.msra.mxu0 %v367
        %421 = vmatprep.subr.bf16.mxu0 0
        %422 = vmatpush1.bf16.msra.mxu0 %v368
        %423 = vmatprep.subr.bf16.mxu0 0
        %424 = vmatpush1.bf16.msra.mxu0 %v369
        %425 = vmatprep.subr.bf16.mxu0 0
        %426 = vmatpush1.bf16.msra.mxu0 %v370
        %427 = vmatprep.subr.bf16.mxu0 0
        %428 = vmatpush1.bf16.msra.mxu0 %v371
        %429 = vmatprep.subr.bf16.mxu0 0
        %430 = vmatpush1.bf16.msra.mxu0 %v372
        %431 = vmatprep.subr.bf16.mxu0 0
        %432 = vmatpush1.bf16.msra.mxu0 %v373
        %433 = vmatprep.subr.bf16.mxu0 0
        %434 = vmatpush1.bf16.msra.mxu0 %v374
        %435 = vmatprep.subr.bf16.mxu0 0
        %436 = vmatpush1.bf16.msra.mxu0 %v375
        %437 = vmatprep.subr.bf16.mxu0 0
        %438 = vmatpush1.bf16.msra.mxu0 %v376
        %439 = vmatprep.subr.bf16.mxu0 0
        %440 = vmatpush1.bf16.msra.mxu0 %v377
        %441 = vmatprep.subr.bf16.mxu0 0
        %442 = vmatpush1.bf16.msra.mxu0 %v378
        %443 = vmatprep.mubr.bf16.mxu0 %v217
        %444 = vmatmul.mubr.bf16.gmra.mrb[0].mxu0 %v216
        %v445 = vpop.f32.mrb[0].mxu0
        %v446 = vadd.f32 0.0, %v445
        %v447 = vpop.f32.mrb[0].mxu0
        %v448 = vpop.f32.mrb[0].mxu0
        %v449 = vpop.f32.mrb[0].mxu0
        %450 = vdwg.mxu0
        %451 = vmatprep.subr.bf16.mxu0 0
        %452 = vmatpush1.bf16.msra.mxu0 %v379
        %453 = vmatprep.subr.bf16.mxu0 0
        %454 = vmatpush1.bf16.msra.mxu0 %v380
        %455 = vmatprep.subr.bf16.mxu0 0
        %456 = vmatpush1.bf16.msra.mxu0 %v381
        %457 = vmatprep.subr.bf16.mxu0 0
        %458 = vmatpush1.bf16.msra.mxu0 %v382
        %459 = vmatprep.subr.bf16.mxu0 0
        %460 = vmatpush1.bf16.msra.mxu0 %v383
        %461 = vmatprep.subr.bf16.mxu0 0
        %462 = vmatpush1.bf16.msra.mxu0 %v384
        %463 = vmatprep.subr.bf16.mxu0 0
        %464 = vmatpush1.bf16.msra.mxu0 %v385
        %465 = vmatprep.subr.bf16.mxu0 0
        %466 = vmatpush1.bf16.msra.mxu0 %v386
        %467 = vmatprep.subr.bf16.mxu0 0
        %468 = vmatpush1.bf16.msra.mxu0 0
        %469 = vmatprep.subr.bf16.mxu0 0
        %470 = vmatpush1.bf16.msra.mxu0 0
        %471 = vmatprep.subr.bf16.mxu0 0
        %472 = vmatpush1.bf16.msra.mxu0 0
        %473 = vmatprep.subr.bf16.mxu0 0
        %474 = vmatpush1.bf16.msra.mxu0 0
        %475 = vmatprep.subr.bf16.mxu0 0
        %476 = vmatpush1.bf16.msra.mxu0 0
        %477 = vmatprep.subr.bf16.mxu0 0
        %478 = vmatpush1.bf16.msra.mxu0 0
        %479 = vmatprep.subr.bf16.mxu0 0
        %480 = vmatpush1.bf16.msra.mxu0 0
        %481 = vmatprep.subr.bf16.mxu0 0
        %482 = vmatpush1.bf16.msra.mxu0 0
        %483 = vmatprep.mubr.bf16.mxu0 0
        %484 = vmatmul.mubr.bf16.gmra.mrb[0].mxu0 %v218
        %v485 = vpop.f32.mrb[0].mxu0
        %v486 = vadd.f32 %v446, %v485
        %v487 = vpop.f32.mrb[0].mxu0
        %v488 = vpop.f32.mrb[0].mxu0
        %v489 = vpop.f32.mrb[0].mxu0
        %490 = vdwg.mxu0
        %v491 = vadd.f32 %v199, %v486
        %492 = vst [vmem:[#allocation2] sm:$0x1] %v491
        %p493 = scmp.eq.s32.totalorder %s20, 1
        // Predicated region
        $region41: #{tpu_custom_call.1} parent=27 // pred_check
          %p494 = pneg %p493
        $region42: #{tpu_custom_call.1} parent=27 // pred_check_branch
          %496 = sbr.rel (%p494) target = $region44
        $region43: #{tpu_custom_call.1} parent=27 // pred_region
          %v497 = vld [vmem:[#allocation2] sm:$0x1]
          %498 = vst [vmem:[#allocation8] sm:$0x1] %v497
        $region44: #{tpu_custom_call.1} parent=27 // pred_fallthru
          _
        // Predicated region
        $region45: #{tpu_custom_call.1} parent=27 // pred_check
          %p499 = pneg %p85
        $region46: #{tpu_custom_call.1} parent=27 // pred_check_branch
          %501 = sbr.rel (%p499) target = $region48
        $region47: #{tpu_custom_call.1} parent=27 // pred_region
          %s503 = ssub.s32 16, 16
          %504 = vsyncadd [#allocation5], %s503
          %s506 = sshll.u32 [#allocation8], 4
          %s507 = int_to_ptr.vmem [resolvable:$true] %s506
          %509 = dma.vmem_to_hbm [thread:$0]  %s507, 16, %s2, [#allocation5]
        $region48: #{tpu_custom_call.1} parent=27 // pred_fallthru
          _
        // Predicated region
        $region49: #{tpu_custom_call.1} parent=27 // pred_check
          %p510 = pneg %p85
        $region50: #{tpu_custom_call.1} parent=27 // pred_check_branch
          %512 = sbr.rel (%p510) target = $region52
        $region51: #{tpu_custom_call.1} parent=27 // pred_region
          %513 = dma.done [#allocation5], 16
        $region52: #{tpu_custom_call.1} parent=27 // pred_fallthru
          _
      $region28: #{tpu_custom_call.1} parent=5 // pred_fallthru
        _
      %p514 = scmp.le.s32.totalorder 2, %s15
      // Predicated region
      $region53: #{tpu_custom_call.1} parent=5 // pred_check
        %p515 = pneg %p514
      $region54: #{tpu_custom_call.1} parent=5 // pred_check_branch
        %517 = sbr.rel (%p515) target = $region56
      $region55: #{tpu_custom_call.1} parent=5 // pred_region
        %s518 = ssub.s32 %s15, 2
      $region56: #{tpu_custom_call.1} parent=5 // pred_fallthru
        _
    $region6: #{tpu_custom_call.1} parent=1 // loop_footer
      %s19 = sadd.s32 1, %s15
    $region7: #{tpu_custom_call.1} parent=1 // loop_footer_branch
      %14 = sbr.rel target = $region3
    $region8: #{tpu_custom_call.1} parent=1 // loop_exit
      _
    %519 = vsyncpa [#allocation4], 1
    %s520 = scalar_lea.sflag [#allocation4], 1
    %521 = vsyncpa %s520, 1
    %522 = vsyncpa [#allocation7], 1
    %s523 = scalar_lea.sflag [#allocation7], 1
    %524 = vsyncpa %s523, 1
    %525 = vsyncpa [#allocation5], 1
    %s526 = scalar_lea.sflag [#allocation5], 1
    %527 = vsyncpa %s526, 1

</llo_original>
